<compile_context>
chip_gen: v7x
topology: tpu7x:2x2x1
jax: 0.10.0
libtpu: 0.0.40
codegen_flags: <defaults>
</compile_context>

<pallas_src>
import math

import jax
import jax.numpy as jnp
from jax.experimental import pallas as pl
from jax.experimental.pallas import tpu as pltpu


def _compute_d_ff(d_model: int) -> int:
    """(8/3)*d_model rounded up to a multiple of 64 (matches the PyTorch module)."""
    rough = 8 * d_model / 3
    return int(math.ceil(rough / 64) * 64)


def _round_up(a: int, b: int) -> int:
    return -(-a // b) * b


def _chip_config():
    """Returns (tile_m, tile_f, tf_align, vmem_capacity_bytes) for this chip."""
    try:
        kind = jax.devices()[0].device_kind.lower()
    except Exception:
        kind = ""
    vmem_cap = None
    try:
        info = pltpu.get_tpu_info()
        vmem_cap = getattr(info, "vmem_capacity_bytes", None)
    except Exception:
        vmem_cap = None

    if "v7" in kind:
        # 64 MiB VMEM/TC, ~310 flops/byte: tm=512 clears the roofline and fits.
        return 512, 256, 256, vmem_cap or (64 << 20)
    if "v6" in kind:
        # 128 MiB VMEM, ~650 flops/byte: tm~1024 for weight-byte reuse; 2x256^2 MXU.
        return 1024, 256, 256, vmem_cap or (128 << 20)
    if "v5" in kind:
        # ~240 flops/byte: tm=256 already at roofline; 4x128^2 MXU -> 128-aligned.
        return 256, 512, 128, vmem_cap or (128 << 20)
    # Unknown chip: conservative tiles that fit a 64 MiB part.
    return 512, 256, 128, vmem_cap or (64 << 20)


def _swiglu_kernel(x_ref, w13_ref, w2_ref, o_ref, acc_ref):
    # grid = (m_tiles, f_tiles); axis 1 (d_ff) is the down-proj reduction.
    f = pl.program_id(1)

    @pl.when(f == 0)
    def _init():
        acc_ref[...] = jnp.zeros_like(acc_ref)

    tf = w2_ref.shape[0]
    x = x_ref[...]                                                    # (tm, d_model)

    # Fused up-projection: one (m,k)x(k,n) MXU matmul producing [h1 | h3].
    h = jnp.dot(x, w13_ref[...], preferred_element_type=jnp.float32)  # (tm, 2*tf)
    h1 = h[:, :tf]
    h3 = h[:, tf:]

    # silu(h1) * h3 in f32 (VPU + EUP), cast back for the MXU down-projection.
    gated = (h1 * jax.nn.sigmoid(h1) * h3).astype(w2_ref.dtype)

    acc_ref[...] += jnp.dot(gated, w2_ref[...],
                            preferred_element_type=jnp.float32)       # (tm, d_model)

    @pl.when(f == pl.num_programs(1) - 1)
    def _store():
        o_ref[...] = acc_ref[...].astype(o_ref.dtype)


def swiglu_pallas(x, w1, w3, w2, *, tile_m=None, tile_f=None,
                  vmem_limit_bytes=None):
    """SwiGLU FFN.

    x  : (B, S, d_model)
    w1 : (d_ff, d_model)   (nn.Linear weight layout)
    w3 : (d_ff, d_model)
    w2 : (d_model, d_ff)
    """
    B, S, d_model = x.shape
    d_ff, d_model_w = w1.shape
    assert d_model_w == d_model and w3.shape == (d_ff, d_model)
    assert w2.shape == (d_model, d_ff)

    tm_def, tf_def, align, vmem_cap = _chip_config()
    if tile_m is None:
        tile_m = tm_def
    if tile_f is None:
        tile_f = tf_def

    # ---- tile selection ----------------------------------------------------
    M = B * S
    x2d = x.reshape(M, d_model)

    tm = min(tile_m, _round_up(M, 8))
    tm = max(8, (tm // 8) * 8)
    M_pad = _round_up(M, tm)
    if M_pad != M:
        x2d = jnp.pad(x2d, ((0, M_pad - M), (0, 0)))

    tf = max(align, (min(tile_f, _round_up(d_ff, align)) // align) * align)
    F_pad = _round_up(d_ff, tf)          # pad d_ff instead of forcing divisors
    nf = F_pad // tf

    # ---- weight preprocessing (one-time, outside the kernel) ----------------
    # Zero-pad to F_pad, interleave W1/W3 at tile granularity and pre-transpose
    # so both kernel dots are standard (m,k)x(k,n): no in-kernel transposes.
    w1p = jnp.pad(w1, ((0, F_pad - d_ff), (0, 0)))            # (F_pad, d_model)
    w3p = jnp.pad(w3, ((0, F_pad - d_ff), (0, 0)))            # (F_pad, d_model)
    w13 = jnp.stack([w1p.reshape(nf, tf, d_model),
                     w3p.reshape(nf, tf, d_model)], axis=1)   # (nf, 2, tf, d_model)
    w13 = w13.reshape(2 * F_pad, d_model).T                   # (d_model, 2*F_pad)
    w2p = jnp.pad(w2, ((0, 0), (0, F_pad - d_ff))).T          # (F_pad, d_model)

    grid = (M_pad // tm, nf)

    # ---- VMEM budget (double-buffered tiles + scratch + live temporaries) ---
    ix, iw, io = x.dtype.itemsize, w1.dtype.itemsize, x.dtype.itemsize
    est = (2 * tm * d_model * ix            # x tile (double-buffered)
           + 2 * d_model * (2 * tf) * iw    # fused W1/W3 tile
           + 2 * tf * d_model * iw          # W2 tile
           + 2 * tm * d_model * io          # output tile
           + tm * d_model * 4               # f32 accumulator
           + tm * (2 * tf) * 4              # h (f32)
           + tm * tf * iw)                  # gated (weight dtype)
    cap = int(vmem_cap * 0.85)              # never exceed physical VMEM (v7x: 64 MiB)
    if vmem_limit_bytes is None:
        vmem_limit_bytes = min(max(32 << 20, int(1.3 * est)), cap)
    vmem_limit_bytes = int(min(vmem_limit_bytes, cap))

    # Weights are re-streamed once per M-tile.
    weight_bytes = (w13.size + w2p.size) * iw
    cost = pl.CostEstimate(
        flops=6 * M_pad * d_model * F_pad,
        transcendentals=M_pad * F_pad,
        bytes_accessed=int(M_pad * d_model * (ix + io)
                           + (M_pad // tm) * weight_bytes),
    )

    out2d = pl.pallas_call(
        _swiglu_kernel,
        out_shape=jax.ShapeDtypeStruct((M_pad, d_model), x.dtype),
        grid_spec=pltpu.PrefetchScalarGridSpec(
            num_scalar_prefetch=0,
            grid=grid,
            in_specs=[
                pl.BlockSpec((tm, d_model), lambda i, f: (i, 0)),       # x rows
                pl.BlockSpec((d_model, 2 * tf), lambda i, f: (0, f)),   # [W1|W3] tile
                pl.BlockSpec((tf, d_model), lambda i, f: (f, 0)),       # W2 tile
            ],
            out_specs=pl.BlockSpec((tm, d_model), lambda i, f: (i, 0)),
            scratch_shapes=[pltpu.VMEM((tm, d_model), jnp.float32)],
        ),
        compiler_params=pltpu.CompilerParams(
            dimension_semantics=("parallel", "arbitrary"),
            vmem_limit_bytes=vmem_limit_bytes,
        ),
        cost_estimate=cost,
    )(x2d, w13, w2p)

    return out2d[:M].reshape(B, S, d_model)


def swiglu_reference(x, w1, w3, w2):
    """Pure-JAX reference matching the PyTorch forward."""
    h1 = jnp.einsum("bsd,fd->bsf", x, w1)
    h3 = jnp.einsum("bsd,fd->bsf", x, w3)
    return jnp.einsum("bsf,df->bsd", h1 * jax.nn.sigmoid(h1) * h3, w2)


if __name__ == "__main__":
    batch, seq, d_model = 2, 8, 128
    d_ff = _compute_d_ff(d_model)  # 384

    key = jax.random.PRNGKey(0)
    kx, k1, k2, k3 = jax.random.split(key, 4)

    x = jax.random.normal(kx, (batch, seq, d_model), dtype=jnp.float32)
    std1 = (2.0 / (d_model + d_ff)) ** 0.5
    std2 = (2.0 / (d_ff + d_model)) ** 0.5
    w1 = std1 * jax.random.normal(k1, (d_ff, d_model), dtype=jnp.float32)
    w3 = std1 * jax.random.normal(k3, (d_ff, d_model), dtype=jnp.float32)
    w2 = std2 * jax.random.normal(k2, (d_model, d_ff), dtype=jnp.float32)

    # f32 correctness check against the pure-JAX reference.
    out = jax.block_until_ready(swiglu_pallas(x, w1, w3, w2))
    ref = swiglu_reference(x, w1, w3, w2)
    assert out.shape == (batch, seq, d_model)
    max_err = float(jnp.max(jnp.abs(out - ref)))
    assert jnp.allclose(out, ref, atol=1e-3, rtol=1e-3), max_err

    # bf16 perf-path smoke run (bf16 MXU operands, f32 accumulate).
    out_bf16 = jax.block_until_ready(
        swiglu_pallas(x.astype(jnp.bfloat16), w1.astype(jnp.bfloat16),
                      w3.astype(jnp.bfloat16), w2.astype(jnp.bfloat16)))
    assert out_bf16.shape == (batch, seq, d_model)
    assert bool(jnp.all(jnp.isfinite(out_bf16.astype(jnp.float32))))

    print("KERNEL_OK")
</pallas_src>

<mosaic_0001>
module attributes {stable_mosaic.version = 11 : i64} {
  func.func @_swiglu_kernel(%arg0: i32, %arg1: i32, %arg2: memref<16x128xf32, #tpu.memory_space<vmem>>, %arg3: memref<128x512xf32, #tpu.memory_space<vmem>>, %arg4: memref<256x128xf32, #tpu.memory_space<vmem>>, %arg5: memref<16x128xf32, #tpu.memory_space<vmem>>, %arg6: memref<16x128xf32, #tpu.memory_space<vmem>>) attributes {dimension_semantics = [#tpu.dimension_semantics<parallel>, #tpu.dimension_semantics<arbitrary>], iteration_bounds = array<i64: 1, 2>, scalar_prefetch = 0 : i64, scratch_operands = 1 : i64, tpu.core_type = #tpu.core_type<tc>, window_params = [{transform_indices = @transform_0, window_bounds = array<i64: 16, 128>}, {transform_indices = @transform_1, window_bounds = array<i64: 128, 512>}, {transform_indices = @transform_2, window_bounds = array<i64: 256, 128>}, {transform_indices = @transform_3, window_bounds = array<i64: 16, 128>}]} {
    %c0_i32 = arith.constant 0 : i32
    %0 = arith.cmpi eq, %arg1, %c0_i32 : i32
    %1 = arith.extui %0 : i1 to i32
    %c0_i32_0 = arith.constant 0 : i32
    %2 = arith.cmpi ne, %1, %c0_i32_0 : i32
    scf.if %2 {
      %cst_13 = arith.constant 0.000000e+00 : f32
      %23 = vector.broadcast %cst_13 : f32 to vector<16x128xf32>
      %c0_14 = arith.constant 0 : index
      %c0_15 = arith.constant 0 : index
      %24 = vector.load %arg6[%c0_14, %c0_15] : memref<16x128xf32, #tpu.memory_space<vmem>>, vector<16x128xf32>
      tpu.vector_store %arg6[%c0_14, %c0_15], %23 {strides = array<i32>} : memref<16x128xf32, #tpu.memory_space<vmem>>, vector<16x128xf32>,
    } else {
    }
    %c0 = arith.constant 0 : index
    %c0_1 = arith.constant 0 : index
    %3 = vector.load %arg2[%c0, %c0_1] : memref<16x128xf32, #tpu.memory_space<vmem>>, vector<16x128xf32>
    %c0_2 = arith.constant 0 : index
    %c0_3 = arith.constant 0 : index
    %4 = vector.load %arg3[%c0_2, %c0_3] : memref<128x512xf32, #tpu.memory_space<vmem>>, vector<128x512xf32>
    %cst = arith.constant dense<0.000000e+00> : vector<16x512xf32>
    %5 = tpu.matmul %3, %4, %cst {dimension_numbers = #tpu.dot_dimension_numbers<[1], [0], [0], [1], [0, 0, 1, 1], [], []>} : vector<16x128xf32>, vector<128x512xf32>, vector<16x512xf32> -> vector<16x512xf32>
    %6 = vector.extract_strided_slice %5 {offsets = [0, 0], sizes = [16, 256], strides = [1, 1]} : vector<16x512xf32> to vector<16x256xf32>
    %7 = vector.extract_strided_slice %5 {offsets = [0, 256], sizes = [16, 256], strides = [1, 1]} : vector<16x512xf32> to vector<16x256xf32>
    %8 = arith.negf %6 : vector<16x256xf32>
    %9 = math.exp %8 : vector<16x256xf32>
    %cst_4 = arith.constant 1.000000e+00 : f32
    %10 = vector.broadcast %cst_4 : f32 to vector<16x256xf32>
    %11 = arith.addf %10, %9 : vector<16x256xf32>
    %12 = arith.divf %10, %11 : vector<16x256xf32>
    %13 = arith.mulf %6, %12 : vector<16x256xf32>
    %14 = arith.mulf %13, %7 : vector<16x256xf32>
    %c0_5 = arith.constant 0 : index
    %c0_6 = arith.constant 0 : index
    %15 = vector.load %arg6[%c0_5, %c0_6] : memref<16x128xf32, #tpu.memory_space<vmem>>, vector<16x128xf32>
    %c0_7 = arith.constant 0 : index
    %c0_8 = arith.constant 0 : index
    %16 = vector.load %arg4[%c0_7, %c0_8] : memref<256x128xf32, #tpu.memory_space<vmem>>, vector<256x128xf32>
    %cst_9 = arith.constant dense<0.000000e+00> : vector<16x128xf32>
    %17 = tpu.matmul %14, %16, %cst_9 {dimension_numbers = #tpu.dot_dimension_numbers<[1], [0], [0], [1], [0, 0, 1, 1], [], []>} : vector<16x256xf32>, vector<256x128xf32>, vector<16x128xf32> -> vector<16x128xf32>
    %18 = arith.addf %15, %17 : vector<16x128xf32>
    %c0_10 = arith.constant 0 : index
    %c0_11 = arith.constant 0 : index
    %19 = vector.load %arg6[%c0_10, %c0_11] : memref<16x128xf32, #tpu.memory_space<vmem>>, vector<16x128xf32>
    tpu.vector_store %arg6[%c0_10, %c0_11], %18 {strides = array<i32>} : memref<16x128xf32, #tpu.memory_space<vmem>>, vector<16x128xf32>,
    %c1_i32 = arith.constant 1 : i32
    %20 = arith.cmpi eq, %arg1, %c1_i32 : i32
    %21 = arith.extui %20 : i1 to i32
    %c0_i32_12 = arith.constant 0 : i32
    %22 = arith.cmpi ne, %21, %c0_i32_12 : i32
    scf.if %22 {
      %c0_13 = arith.constant 0 : index
      %c0_14 = arith.constant 0 : index
      %23 = vector.load %arg6[%c0_13, %c0_14] : memref<16x128xf32, #tpu.memory_space<vmem>>, vector<16x128xf32>
      %c0_15 = arith.constant 0 : index
      %c0_16 = arith.constant 0 : index
      %24 = vector.load %arg5[%c0_15, %c0_16] : memref<16x128xf32, #tpu.memory_space<vmem>>, vector<16x128xf32>
      tpu.vector_store %arg5[%c0_15, %c0_16], %23 {strides = array<i32>} : memref<16x128xf32, #tpu.memory_space<vmem>>, vector<16x128xf32>,
    } else {
    }
    return
  }
  func.func @transform_0(%arg0: i32, %arg1: i32) -> (i32, i32) {
    %c0_i32 = arith.constant 0 : i32
    %c0_i32_0 = arith.constant 0 : i32
    return %arg0, %c0_i32 : i32, i32
  }
  func.func @transform_1(%arg0: i32, %arg1: i32) -> (i32, i32) {
    %c0_i32 = arith.constant 0 : i32
    %c0_i32_0 = arith.constant 0 : i32
    return %c0_i32, %arg1 : i32, i32
  }
  func.func @transform_2(%arg0: i32, %arg1: i32) -> (i32, i32) {
    %c0_i32 = arith.constant 0 : i32
    %c0_i32_0 = arith.constant 0 : i32
    return %arg1, %c0_i32 : i32, i32
  }
  func.func @transform_3(%arg0: i32, %arg1: i32) -> (i32, i32) {
    %c0_i32 = arith.constant 0 : i32
    %c0_i32_0 = arith.constant 0 : i32
    return %arg0, %c0_i32 : i32, i32
  }
}

</mosaic_0001>

<llo_original>
// kernel: tpu_custom_call.1
$region0: #{tpu_custom_call.1}
  #allocation0 [shape = 'u32[]', space=smem, size = 0x4, offset = 0x4, fixed_abs, tag = 'smem constant byte address 0x4 - core index']
  #allocation1 [shape = 'u32[144,128]{1,0:T(1,128)}', space=vmem, size = 0x12000, scoped, tag = 'internal scratch']
  #allocation2 [shape = 'f32[16,128]{1,0:T(8,128)}', space=vmem, size = 0x2000, scoped, tag = 'scratch operand']
  %s0 = inlined_call_operand.hbm [shape: f32[16,128], index: 0, kind: input, shape index: {}]
  %s1 = inlined_call_operand.hbm [shape: f32[128,1024], index: 1, kind: input, shape index: {}]
  %s2 = inlined_call_operand.hbm [shape: f32[512,128], index: 2, kind: input, shape index: {}]
  %s3 = inlined_call_operand.hbm [shape: f32[16,128], index: 3, kind: output, shape index: {}]
  %s4 = sld [smem:[#allocation0]]
  $region65: #{tpu_custom_call.1} parent=0
    _
  %s6 = ssub.s32 1, %s4
  %s7 = scalar_select 0, %s6, %s4
  $region1: #{tpu_custom_call.1} parent=0
    #allocation3 [shape = 'u8[8192]{0}', space=vmem, size = 0x2000, scoped, tag = 'input window, operand 0, single buffered']
    #allocation4 [shape = 's32[2]{0}', space=sflag, size = 0x8, scoped, tag = 'scoped memory for tpu_custom_call.1']
    #allocation5 [shape = 's32[2]{0}', space=sflag, size = 0x8, scoped, tag = 'scoped memory for tpu_custom_call.1']
    #allocation6 [shape = 'u8[524288]{0}', space=vmem, size = 0x80000, scoped, tag = 'input window, operand 1']
    #allocation7 [shape = 's32[2]{0}', space=sflag, size = 0x8, scoped, tag = 'scoped memory for tpu_custom_call.1']
    #allocation8 [shape = 'u8[262144]{0}', space=vmem, size = 0x40000, scoped, tag = 'input window, operand 2']
    #allocation9 [shape = 'u8[8192]{0}', space=vmem, size = 0x2000, scoped, tag = 'output window, operand 0, single buffered']
    %8 = vsyncpa [#allocation4], 0
    %9 = vsyncpa [#allocation7], 0
    %s10 = scalar_lea.sflag [#allocation7], 1
    %11 = vsyncpa %s10, 0
    %12 = vsyncpa [#allocation5], 0
    loop: start=0, step=1, limit=4
    $region2: #{tpu_custom_call.1} parent=1 // loop_pre_header
      _
    $region3: #{tpu_custom_call.1} parent=1 // loop_header
      %s14 = sphi 0, %s18
      %p15 = scmp.ge.s32.totalorder %s14, 4
      %s21 = sphi 0, %s33
      %s22 = sphi 0, %s29
      %s23 = sphi 0, %s21
      %s24 = sphi 0, %s22
      %s25 = sphi 0, %s23
      %s26 = sphi 0, %s24
      %s36 = sphi 0, %s38
      %s39 = sphi 0, %s36
      %s40 = sphi 0, %s39
      %s56 = sphi 0, %s40
      %s62 = sphi 0, %s64
      %s65 = sphi 0, %s62
      %s66 = sphi 0, %s65
      %s82 = sphi 0, %s66
      %s88 = sphi 0, %s90
      %s91 = sphi 0, %s88
      %s92 = sphi 0, %s91
      %s108 = sphi 0, %s92
      %s114 = sphi 0, %s116
      %s117 = sphi 0, %s114
      %s118 = sphi 0, %s117
      %s134 = sphi 0, %s118
    $region4: #{tpu_custom_call.1} parent=1 // loop_header_branch
      %17 = sbr.rel (%p15) target = $region8
    $region5: #{tpu_custom_call.1} parent=1 // loop_body
      %s19 = ssub.s32 %s14, 1
      %s20 = ssub.s32 %s14, 2
      %s27 = sadd.s32 1, %s22
      %p28 = scmp.ge.s32.totalorder %s27, 2
      %s29 = scalar_select %p28, 0, %s27
      %s30 = sadd.s32 1, %s21
      %s31 = scalar_select %p28, %s30, %s21
      %p32 = scmp.ge.s32.totalorder %s31, 1
      %s33 = scalar_select %p32, 0, %s31
      %s34 = ssub.s32 %s21, %s33
      %p35 = scmp.eq.s32.totalorder %s34, 0
      %s37 = sadd.s32 %s36, 1
      %s38 = scalar_select %p35, %s36, %s37
      %p41 = pneg %p35
      %p42 = scmp.eq.s32.totalorder %s14, 1
      %p43 = por %p41, %p42
      %p44 = scmp.ne.s32.totalorder %s36, %s39
      %p45 = scmp.eq.s32.totalorder %s14, 0
      %p46 = por %p44, %p45
      %p47 = scmp.ne.s32.totalorder %s36, %s39
      %p48 = scmp.eq.s32.totalorder %s19, 1
      %p49 = por %p47, %p48
      %p50 = scmp.ne.s32.totalorder %s39, %s40
      %p51 = scmp.eq.s32.totalorder %s19, 0
      %p52 = por %p50, %p51
      %p53 = scmp.ne.s32.totalorder %s39, %s40
      %p54 = scmp.eq.s32.totalorder %s20, 1
      %p55 = por %p53, %p54
      %p57 = scmp.ne.s32.totalorder %s40, %s56
      %p58 = scmp.eq.s32.totalorder %s20, 0
      %p59 = por %p57, %p58
      %s60 = ssub.s32 %s22, %s29
      %p61 = scmp.eq.s32.totalorder %s60, 0
      %s63 = sadd.s32 %s62, 1
      %s64 = scalar_select %p61, %s62, %s63
      %p67 = pneg %p61
      %p68 = scmp.eq.s32.totalorder %s14, 1
      %p69 = por %p67, %p68
      %p70 = scmp.ne.s32.totalorder %s62, %s65
      %p71 = scmp.eq.s32.totalorder %s14, 0
      %p72 = por %p70, %p71
      %p73 = scmp.ne.s32.totalorder %s62, %s65
      %p74 = scmp.eq.s32.totalorder %s19, 1
      %p75 = por %p73, %p74
      %p76 = scmp.ne.s32.totalorder %s65, %s66
      %p77 = scmp.eq.s32.totalorder %s19, 0
      %p78 = por %p76, %p77
      %p79 = scmp.ne.s32.totalorder %s65, %s66
      %p80 = scmp.eq.s32.totalorder %s20, 1
      %p81 = por %p79, %p80
      %p83 = scmp.ne.s32.totalorder %s66, %s82
      %p84 = scmp.eq.s32.totalorder %s20, 0
      %p85 = por %p83, %p84
      %s86 = ssub.s32 %s22, %s29
      %p87 = scmp.eq.s32.totalorder %s86, 0
      %s89 = sadd.s32 %s88, 1
      %s90 = scalar_select %p87, %s88, %s89
      %p93 = pneg %p87
      %p94 = scmp.eq.s32.totalorder %s14, 1
      %p95 = por %p93, %p94
      %p96 = scmp.ne.s32.totalorder %s88, %s91
      %p97 = scmp.eq.s32.totalorder %s14, 0
      %p98 = por %p96, %p97
      %p99 = scmp.ne.s32.totalorder %s88, %s91
      %p100 = scmp.eq.s32.totalorder %s19, 1
      %p101 = por %p99, %p100
      %p102 = scmp.ne.s32.totalorder %s91, %s92
      %p103 = scmp.eq.s32.totalorder %s19, 0
      %p104 = por %p102, %p103
      %p105 = scmp.ne.s32.totalorder %s91, %s92
      %p106 = scmp.eq.s32.totalorder %s20, 1
      %p107 = por %p105, %p106
      %p109 = scmp.ne.s32.totalorder %s92, %s108
      %p110 = scmp.eq.s32.totalorder %s20, 0
      %p111 = por %p109, %p110
      %s112 = ssub.s32 %s21, %s33
      %p113 = scmp.eq.s32.totalorder %s112, 0
      %s115 = sadd.s32 %s114, 1
      %s116 = scalar_select %p113, %s114, %s115
      %p119 = pneg %p113
      %p120 = scmp.eq.s32.totalorder %s14, 1
      %p121 = por %p119, %p120
      %p122 = scmp.ne.s32.totalorder %s114, %s117
      %p123 = scmp.eq.s32.totalorder %s14, 0
      %p124 = por %p122, %p123
      %p125 = scmp.ne.s32.totalorder %s114, %s117
      %p126 = scmp.eq.s32.totalorder %s19, 1
      %p127 = por %p125, %p126
      %p128 = scmp.ne.s32.totalorder %s117, %s118
      %p129 = scmp.eq.s32.totalorder %s19, 0
      %p130 = por %p128, %p129
      %p131 = scmp.ne.s32.totalorder %s117, %s118
      %p132 = scmp.eq.s32.totalorder %s20, 1
      %p133 = por %p131, %p132
      %p135 = scmp.ne.s32.totalorder %s118, %s134
      %p136 = scmp.eq.s32.totalorder %s20, 0
      %p137 = por %p135, %p136
      %p138 = scmp.le.s32.totalorder 1, %s14
      %p139 = scmp.lt.s32.totalorder %s14, 3
      %p140 = pnand %p138, %p139
      %p141 = pneg %p140
      // Predicated region
      $region9: #{tpu_custom_call.1} parent=5 // pred_check
        _
      $region10: #{tpu_custom_call.1} parent=5 // pred_check_branch
        %143 = sbr.rel (%p140) target = $region12
      $region11: #{tpu_custom_call.1} parent=5 // pred_region
        %s144 = ssub.s32 %s14, 1
        // Predicated region
        $region13: #{tpu_custom_call.1} parent=11 // pred_check
          %p145 = pneg %p52
        $region14: #{tpu_custom_call.1} parent=11 // pred_check_branch
          %147 = sbr.rel (%p145) target = $region16
        $region15: #{tpu_custom_call.1} parent=11 // pred_region
          %s148 = smul.u32 2, %s23
          %s150 = ssub.s32 256, 256
          %151 = vsyncadd [#allocation4], %s150
          %s152 = smul.addr %s148, 128
          %s153 = scalar_lea.hbm %s0, %s152
          %s154 = sshll.u32 [#allocation3], 4
          %s155 = int_to_ptr.vmem [resolvable:$true] %s154
          %160 = dma.hbm_to_vmem [thread:$0]  %s153, 256, %s155, [#allocation4], 128, 128, 8
        $region16: #{tpu_custom_call.1} parent=11 // pred_fallthru
          _
      $region12: #{tpu_custom_call.1} parent=5 // pred_fallthru
        _
      %p161 = scmp.lt.s32.totalorder %s14, 2
      // Predicated region
      $region17: #{tpu_custom_call.1} parent=5 // pred_check
        %p162 = pneg %p161
      $region18: #{tpu_custom_call.1} parent=5 // pred_check_branch
        %164 = sbr.rel (%p162) target = $region20
      $region19: #{tpu_custom_call.1} parent=5 // pred_region
        // Predicated region
        $region21: #{tpu_custom_call.1} parent=19 // pred_check
          %p165 = pneg %p72
        $region22: #{tpu_custom_call.1} parent=19 // pred_check_branch
          %167 = sbr.rel (%p165) target = $region24
        $region23: #{tpu_custom_call.1} parent=19 // pred_region
          %s168 = sand.u32 %s14, 1
          %s169 = scalar_lea.sflag [#allocation7], %s168
          %s170 = sand.u32 %s62, 1
          %s171 = smul.addr %s170, 512
          %s172 = scalar_lea.vmem [#allocation6], %s171
          %s173 = smul.u32 4, %s22
          %s175 = ssub.s32 8192, 8192
          %176 = vsyncadd %s169, %s175
          %s177 = smul.addr %s173, 128
          %s178 = scalar_lea.hbm %s1, %s177
          %s179 = sshll.u32 %s172, 4
          %s180 = int_to_ptr.vmem [resolvable:$true] %s179
          %185 = dma.hbm_to_vmem [thread:$0]  %s178, 8192, %s180, %s169, 1024, 512, 32
        $region24: #{tpu_custom_call.1} parent=19 // pred_fallthru
          _
        // Predicated region
        $region25: #{tpu_custom_call.1} parent=19 // pred_check
          %p186 = pneg %p98
        $region26: #{tpu_custom_call.1} parent=19 // pred_check_branch
          %188 = sbr.rel (%p186) target = $region28
        $region27: #{tpu_custom_call.1} parent=19 // pred_region
          %s189 = sand.u32 %s14, 1
          %s190 = scalar_lea.sflag [#allocation7], %s189
          %s191 = sand.u32 %s88, 1
          %s192 = smul.addr %s191, 256
          %s193 = scalar_lea.vmem [#allocation8], %s192
          %s194 = smul.u32 32, %s22
          %s196 = ssub.s32 4096, 4096
          %197 = vsyncadd %s190, %s196
          %s198 = smul.addr %s194, 128
          %s199 = scalar_lea.hbm %s2, %s198
          %s200 = sshll.u32 %s193, 4
          %s201 = int_to_ptr.vmem [resolvable:$true] %s200
          %206 = dma.hbm_to_vmem [thread:$0]  %s199, 4096, %s201, %s190, 128, 128, 8
        $region28: #{tpu_custom_call.1} parent=19 // pred_fallthru
          _
      $region20: #{tpu_custom_call.1} parent=5 // pred_fallthru
        _
      %p207 = scmp.le.s32.totalorder 1, %s14
      %p208 = scmp.lt.s32.totalorder %s14, 3
      %p209 = pnand %p207, %p208
      %p210 = pneg %p209
      // Predicated region
      $region29: #{tpu_custom_call.1} parent=5 // pred_check
        _
      $region30: #{tpu_custom_call.1} parent=5 // pred_check_branch
        %212 = sbr.rel (%p209) target = $region32
      $region31: #{tpu_custom_call.1} parent=5 // pred_region
        %s213 = ssub.s32 %s14, 1
        // Predicated region
        $region33: #{tpu_custom_call.1} parent=31 // pred_check
          %p214 = pneg %p52
        $region34: #{tpu_custom_call.1} parent=31 // pred_check_branch
          %216 = sbr.rel (%p214) target = $region36
        $region35: #{tpu_custom_call.1} parent=31 // pred_region
          %217 = dma.done [#allocation4], 256
        $region36: #{tpu_custom_call.1} parent=31 // pred_fallthru
          _
        %s218 = sand.u32 %s19, 1
        %s219 = scalar_lea.sflag [#allocation7], %s218
        %s220 = sand.u32 %s65, 1
        %s221 = smul.addr %s220, 512
        %s222 = scalar_lea.vmem [#allocation6], %s221
        // Predicated region
        $region37: #{tpu_custom_call.1} parent=31 // pred_check
          %p223 = pneg %p78
        $region38: #{tpu_custom_call.1} parent=31 // pred_check_branch
          %225 = sbr.rel (%p223) target = $region40
        $region39: #{tpu_custom_call.1} parent=31 // pred_region
          %226 = dma.done %s219, 8192
        $region40: #{tpu_custom_call.1} parent=31 // pred_fallthru
          _
        %s227 = sand.u32 %s19, 1
        %s228 = scalar_lea.sflag [#allocation7], %s227
        %s229 = sand.u32 %s91, 1
        %s230 = smul.addr %s229, 256
        %s231 = scalar_lea.vmem [#allocation8], %s230
        // Predicated region
        $region41: #{tpu_custom_call.1} parent=31 // pred_check
          %p232 = pneg %p104
        $region42: #{tpu_custom_call.1} parent=31 // pred_check_branch
          %234 = sbr.rel (%p232) target = $region44
        $region43: #{tpu_custom_call.1} parent=31 // pred_region
          %235 = dma.done %s228, 4096
        $region44: #{tpu_custom_call.1} parent=31 // pred_fallthru
          _
        %p236 = pneg %p52
        %p237 = pneg %p49
        %s238 = sand.u32 %s19, 1
        %s239 = scalar_lea.sflag [#allocation7], %s238
        %s240 = sand.u32 %s65, 1
        %s241 = smul.addr %s240, 512
        %s242 = scalar_lea.vmem [#allocation6], %s241
        %p243 = pneg %p78
        %p244 = pneg %p75
        %s245 = sand.u32 %s19, 1
        %s246 = scalar_lea.sflag [#allocation7], %s245
        %s247 = sand.u32 %s91, 1
        %s248 = smul.addr %s247, 256
        %s249 = scalar_lea.vmem [#allocation8], %s248
        %p250 = pneg %p104
        %p251 = pneg %p101
        %p252 = pneg %p130
        %p253 = pneg %p127
        %s254 = smul.u32 2, %s23
        %s255 = smul.u32 4, %s24
        %s256 = smul.u32 32, %s24
        %s257 = smul.u32 2, %s23
        %p258 = scmp.eq.s32.totalorder %s24, 0
        // Predicated region
        $region45: #{tpu_custom_call.1} parent=31 // pred_check
          %p259 = pneg %p258
        $region46: #{tpu_custom_call.1} parent=31 // pred_check_branch
          %261 = sbr.rel (%p259) target = $region48
        $region47: #{tpu_custom_call.1} parent=31 // pred_region
          %262 = vst [vmem:[#allocation2] sm:$0xff] 0.0
          %263 = vst [vmem:[#allocation2 + $0x8] sm:$0xff] 0.0
        $region48: #{tpu_custom_call.1} parent=31 // pred_fallthru
          _
        %v264 = vld [vmem:[#allocation3] sm:$0xff]
        %v265 = vld [vmem:[#allocation3 + $0x8] sm:$0xff]
        %v266 = vld [vmem:[%s222] sm:$0xff]
        %v267 = vld [vmem:[%s222 + $0x8] sm:$0xff]
        %v268 = vld [vmem:[%s222 + $0x10] sm:$0xff]
        %v269 = vld [vmem:[%s222 + $0x18] sm:$0xff]
        %v270 = vld [vmem:[%s222 + $0x20] sm:$0xff]
        %v271 = vld [vmem:[%s222 + $0x28] sm:$0xff]
        %v272 = vld [vmem:[%s222 + $0x30] sm:$0xff]
        %v273 = vld [vmem:[%s222 + $0x38] sm:$0xff]
        %v274 = vld [vmem:[%s222 + $0x40] sm:$0xff]
        %v275 = vld [vmem:[%s222 + $0x48] sm:$0xff]
        %v276 = vld [vmem:[%s222 + $0x50] sm:$0xff]
        %v277 = vld [vmem:[%s222 + $0x58] sm:$0xff]
        %v278 = vld [vmem:[%s222 + $0x60] sm:$0xff]
        %v279 = vld [vmem:[%s222 + $0x68] sm:$0xff]
        %v280 = vld [vmem:[%s222 + $0x70] sm:$0xff]
        %v281 = vld [vmem:[%s222 + $0x78] sm:$0xff]
        %v282 = vld [vmem:[%s222 + $0x80] sm:$0xff]
        %v283 = vld [vmem:[%s222 + $0x88] sm:$0xff]
        %v284 = vld [vmem:[%s222 + $0x90] sm:$0xff]
        %v285 = vld [vmem:[%s222 + $0x98] sm:$0xff]
        %v286 = vld [vmem:[%s222 + $0xa0] sm:$0xff]
        %v287 = vld [vmem:[%s222 + $0xa8] sm:$0xff]
        %v288 = vld [vmem:[%s222 + $0xb0] sm:$0xff]
        %v289 = vld [vmem:[%s222 + $0xb8] sm:$0xff]
        %v290 = vld [vmem:[%s222 + $0xc0] sm:$0xff]
        %v291 = vld [vmem:[%s222 + $0xc8] sm:$0xff]
        %v292 = vld [vmem:[%s222 + $0xd0] sm:$0xff]
        %v293 = vld [vmem:[%s222 + $0xd8] sm:$0xff]
        %v294 = vld [vmem:[%s222 + $0xe0] sm:$0xff]
        %v295 = vld [vmem:[%s222 + $0xe8] sm:$0xff]
        %v296 = vld [vmem:[%s222 + $0xf0] sm:$0xff]
        %v297 = vld [vmem:[%s222 + $0xf8] sm:$0xff]
        %v298 = vld [vmem:[%s222 + $0x100] sm:$0xff]
        %v299 = vld [vmem:[%s222 + $0x108] sm:$0xff]
        %v300 = vld [vmem:[%s222 + $0x110] sm:$0xff]
        %v301 = vld [vmem:[%s222 + $0x118] sm:$0xff]
        %v302 = vld [vmem:[%s222 + $0x120] sm:$0xff]
        %v303 = vld [vmem:[%s222 + $0x128] sm:$0xff]
        %v304 = vld [vmem:[%s222 + $0x130] sm:$0xff]
        %v305 = vld [vmem:[%s222 + $0x138] sm:$0xff]
        %v306 = vld [vmem:[%s222 + $0x140] sm:$0xff]
        %v307 = vld [vmem:[%s222 + $0x148] sm:$0xff]
        %v308 = vld [vmem:[%s222 + $0x150] sm:$0xff]
        %v309 = vld [vmem:[%s222 + $0x158] sm:$0xff]
        %v310 = vld [vmem:[%s222 + $0x160] sm:$0xff]
        %v311 = vld [vmem:[%s222 + $0x168] sm:$0xff]
        %v312 = vld [vmem:[%s222 + $0x170] sm:$0xff]
        %v313 = vld [vmem:[%s222 + $0x178] sm:$0xff]
        %v314 = vld [vmem:[%s222 + $0x180] sm:$0xff]
        %v315 = vld [vmem:[%s222 + $0x188] sm:$0xff]
        %v316 = vld [vmem:[%s222 + $0x190] sm:$0xff]
        %v317 = vld [vmem:[%s222 + $0x198] sm:$0xff]
        %v318 = vld [vmem:[%s222 + $0x1a0] sm:$0xff]
        %v319 = vld [vmem:[%s222 + $0x1a8] sm:$0xff]
        %v320 = vld [vmem:[%s222 + $0x1b0] sm:$0xff]
        %v321 = vld [vmem:[%s222 + $0x1b8] sm:$0xff]
        %v322 = vld [vmem:[%s222 + $0x1c0] sm:$0xff]
        %v323 = vld [vmem:[%s222 + $0x1c8] sm:$0xff]
        %v324 = vld [vmem:[%s222 + $0x1d0] sm:$0xff]
        %v325 = vld [vmem:[%s222 + $0x1d8] sm:$0xff]
        %v326 = vld [vmem:[%s222 + $0x1e0] sm:$0xff]
        %v327 = vld [vmem:[%s222 + $0x1e8] sm:$0xff]
        %v328 = vld [vmem:[%s222 + $0x1f0] sm:$0xff]
        %v329 = vld [vmem:[%s222 + $0x1f8] sm:$0xff]
        %330 = vmatprep.subr.mxu0 %v267
        %331 = vmatpush1.msra.mxu0 %v266
        %332 = vmatprep.subr.mxu0 %v271
        %333 = vmatpush1.msra.mxu0 %v270
        %334 = vmatprep.subr.mxu0 %v275
        %335 = vmatpush1.msra.mxu0 %v274
        %336 = vmatprep.subr.mxu0 %v279
        %337 = vmatpush1.msra.mxu0 %v278
        %338 = vmatprep.subr.mxu0 %v283
        %339 = vmatpush1.msra.mxu0 %v282
        %340 = vmatprep.subr.mxu0 %v287
        %341 = vmatpush1.msra.mxu0 %v286
        %342 = vmatprep.subr.mxu0 %v291
        %343 = vmatpush1.msra.mxu0 %v290
        %344 = vmatprep.subr.mxu0 %v295
        %345 = vmatpush1.msra.mxu0 %v294
        %346 = vmatprep.subr.mxu0 %v299
        %347 = vmatpush1.msra.mxu0 %v298
        %348 = vmatprep.subr.mxu0 %v303
        %349 = vmatpush1.msra.mxu0 %v302
        %350 = vmatprep.subr.mxu0 %v307
        %351 = vmatpush1.msra.mxu0 %v306
        %352 = vmatprep.subr.mxu0 %v311
        %353 = vmatpush1.msra.mxu0 %v310
        %354 = vmatprep.subr.mxu0 %v315
        %355 = vmatpush1.msra.mxu0 %v314
        %356 = vmatprep.subr.mxu0 %v319
        %357 = vmatpush1.msra.mxu0 %v318
        %358 = vmatprep.subr.mxu0 %v323
        %359 = vmatpush1.msra.mxu0 %v322
        %360 = vmatprep.subr.mxu0 %v327
        %361 = vmatpush1.msra.mxu0 %v326
        %362 = vmatprep.subr.mxu0 0.0
        %363 = vmatpush1.msra.mxu0 0.0
        %364 = vmatprep.subr.mxu0 0.0
        %365 = vmatpush1.msra.mxu0 0.0
        %366 = vmatprep.subr.mxu0 0.0
        %367 = vmatpush1.msra.mxu0 0.0
        %368 = vmatprep.subr.mxu0 0.0
        %369 = vmatpush1.msra.mxu0 0.0
        %370 = vmatprep.subr.mxu0 0.0
        %371 = vmatpush1.msra.mxu0 0.0
        %372 = vmatprep.subr.mxu0 0.0
        %373 = vmatpush1.msra.mxu0 0.0
        %374 = vmatprep.subr.mxu0 0.0
        %375 = vmatpush1.msra.mxu0 0.0
        %376 = vmatprep.subr.mxu0 0.0
        %377 = vmatpush1.msra.mxu0 0.0
        %378 = vmatprep.subr.mxu0 0.0
        %379 = vmatpush1.msra.mxu0 0.0
        %380 = vmatprep.subr.mxu0 0.0
        %381 = vmatpush1.msra.mxu0 0.0
        %382 = vmatprep.subr.mxu0 0.0
        %383 = vmatpush1.msra.mxu0 0.0
        %384 = vmatprep.subr.mxu0 0.0
        %385 = vmatpush1.msra.mxu0 0.0
        %386 = vmatprep.subr.mxu0 0.0
        %387 = vmatpush1.msra.mxu0 0.0
        %388 = vmatprep.subr.mxu0 0.0
        %389 = vmatpush1.msra.mxu0 0.0
        %390 = vmatprep.subr.mxu0 0.0
        %391 = vmatpush1.msra.mxu0 0.0
        %392 = vmatprep.subr.mxu0 0.0
        %393 = vmatpush1.msra.mxu0 0.0
        %394 = vmatprep.mubr.f32.mxu0 0.0
        %395 = vmatmul.mubr.f32.gmra.mrb[0].mxu0 %v264
        %v396 = vpop.f32.mrb[0].mxu0
        %v397 = vadd.f32 0.0, %v396
        %v398 = vpop.f32.mrb[0].mxu0
        %v399 = vadd.f32 0.0, %v398
        %400 = vmatprep.mubr.f32.mxu0 0.0
        %401 = vmatmul.mubr.f32.gmra.mrb[0].mxu0 %v265
        %v402 = vpop.f32.mrb[0].mxu0
        %v403 = vadd.f32 0.0, %v402
        %v404 = vpop.f32.mrb[0].mxu0
        %v405 = vadd.f32 0.0, %v404
        %406 = vdwg.mxu0
        %407 = vmatprep.subr.mxu0 %v269
        %408 = vmatpush1.msra.mxu0 %v268
        %409 = vmatprep.subr.mxu0 %v273
        %410 = vmatpush1.msra.mxu0 %v272
        %411 = vmatprep.subr.mxu0 %v277
        %412 = vmatpush1.msra.mxu0 %v276
        %413 = vmatprep.subr.mxu0 %v281
        %414 = vmatpush1.msra.mxu0 %v280
        %415 = vmatprep.subr.mxu0 %v285
        %416 = vmatpush1.msra.mxu0 %v284
        %417 = vmatprep.subr.mxu0 %v289
        %418 = vmatpush1.msra.mxu0 %v288
        %419 = vmatprep.subr.mxu0 %v293
        %420 = vmatpush1.msra.mxu0 %v292
        %421 = vmatprep.subr.mxu0 %v297
        %422 = vmatpush1.msra.mxu0 %v296
        %423 = vmatprep.subr.mxu0 %v301
        %424 = vmatpush1.msra.mxu0 %v300
        %425 = vmatprep.subr.mxu0 %v305
        %426 = vmatpush1.msra.mxu0 %v304
        %427 = vmatprep.subr.mxu0 %v309
        %428 = vmatpush1.msra.mxu0 %v308
        %429 = vmatprep.subr.mxu0 %v313
        %430 = vmatpush1.msra.mxu0 %v312
        %431 = vmatprep.subr.mxu0 %v317
        %432 = vmatpush1.msra.mxu0 %v316
        %433 = vmatprep.subr.mxu0 %v321
        %434 = vmatpush1.msra.mxu0 %v320
        %435 = vmatprep.subr.mxu0 %v325
        %436 = vmatpush1.msra.mxu0 %v324
        %437 = vmatprep.subr.mxu0 %v329
        %438 = vmatpush1.msra.mxu0 %v328
        %439 = vmatprep.subr.mxu0 0.0
        %440 = vmatpush1.msra.mxu0 0.0
        %441 = vmatprep.subr.mxu0 0.0
        %442 = vmatpush1.msra.mxu0 0.0
        %443 = vmatprep.subr.mxu0 0.0
        %444 = vmatpush1.msra.mxu0 0.0
        %445 = vmatprep.subr.mxu0 0.0
        %446 = vmatpush1.msra.mxu0 0.0
        %447 = vmatprep.subr.mxu0 0.0
        %448 = vmatpush1.msra.mxu0 0.0
        %449 = vmatprep.subr.mxu0 0.0
        %450 = vmatpush1.msra.mxu0 0.0
        %451 = vmatprep.subr.mxu0 0.0
        %452 = vmatpush1.msra.mxu0 0.0
        %453 = vmatprep.subr.mxu0 0.0
        %454 = vmatpush1.msra.mxu0 0.0
        %455 = vmatprep.subr.mxu0 0.0
        %456 = vmatpush1.msra.mxu0 0.0
        %457 = vmatprep.subr.mxu0 0.0
        %458 = vmatpush1.msra.mxu0 0.0
        %459 = vmatprep.subr.mxu0 0.0
        %460 = vmatpush1.msra.mxu0 0.0
        %461 = vmatprep.subr.mxu0 0.0
        %462 = vmatpush1.msra.mxu0 0.0
        %463 = vmatprep.subr.mxu0 0.0
        %464 = vmatpush1.msra.mxu0 0.0
        %465 = vmatprep.subr.mxu0 0.0
        %466 = vmatpush1.msra.mxu0 0.0
        %467 = vmatprep.subr.mxu0 0.0
        %468 = vmatpush1.msra.mxu0 0.0
        %469 = vmatprep.subr.mxu0 0.0
        %470 = vmatpush1.msra.mxu0 0.0
        %471 = vmatprep.mubr.f32.mxu0 0.0
        %472 = vmatmul.mubr.f32.gmra.mrb[0].mxu0 %v264
        %v473 = vpop.f32.mrb[0].mxu0
        %v474 = vadd.f32 0.0, %v473
        %v475 = vpop.f32.mrb[0].mxu0
        %v476 = vadd.f32 0.0, %v475
        %477 = vmatprep.mubr.f32.mxu0 0.0
        %478 = vmatmul.mubr.f32.gmra.mrb[0].mxu0 %v265
        %v479 = vpop.f32.mrb[0].mxu0
        %v480 = vadd.f32 0.0, %v479
        %v481 = vpop.f32.mrb[0].mxu0
        %v482 = vadd.f32 0.0, %v481
        %483 = vdwg.mxu0
        %v484 = vxor.u32 %v397, 2147483648
        %v485 = vxor.u32 %v399, 2147483648
        %v486 = vxor.u32 %v403, 2147483648
        %v487 = vxor.u32 %v405, 2147483648
        %v488 = vmul.f32 %v484, 1.442695
        %v489 = vpow.pop %v488
        %v490 = vmul.f32 %v485, 1.442695
        %v491 = vpow.pop %v490
        %v492 = vmul.f32 %v486, 1.442695
        %v493 = vpow.pop %v492
        %v494 = vmul.f32 %v487, 1.442695
        %v495 = vpow.pop %v494
        %v496 = vadd.f32 %v489, 1.0
        %v497 = vadd.f32 %v491, 1.0
        %v498 = vadd.f32 %v493, 1.0
        %v499 = vadd.f32 %v495, 1.0
        %v500 = vrcp.pop %v496
        %v501 = vmul.f32 1.0, %v500
        %v502 = vrcp.pop %v497
        %v503 = vmul.f32 1.0, %v502
        %v504 = vrcp.pop %v498
        %v505 = vmul.f32 1.0, %v504
        %v506 = vrcp.pop %v499
        %v507 = vmul.f32 1.0, %v506
        %v508 = vmul.f32 %v397, %v501
        %v509 = vmul.f32 %v399, %v503
        %v510 = vmul.f32 %v403, %v505
        %v511 = vmul.f32 %v405, %v507
        %v512 = vmul.f32 %v508, %v474
        %v513 = vmul.f32 %v509, %v476
        %v514 = vmul.f32 %v510, %v480
        %v515 = vmul.f32 %v511, %v482
        %v516 = vld [vmem:[#allocation2] sm:$0xff]
        %v517 = vld [vmem:[#allocation2 + $0x8] sm:$0xff]
        %v518 = vld [vmem:[%s231] sm:$0xff]
        %v519 = vld [vmem:[%s231 + $0x8] sm:$0xff]
        %v520 = vld [vmem:[%s231 + $0x10] sm:$0xff]
        %v521 = vld [vmem:[%s231 + $0x18] sm:$0xff]
        %v522 = vld [vmem:[%s231 + $0x20] sm:$0xff]
        %v523 = vld [vmem:[%s231 + $0x28] sm:$0xff]
        %v524 = vld [vmem:[%s231 + $0x30] sm:$0xff]
        %v525 = vld [vmem:[%s231 + $0x38] sm:$0xff]
        %v526 = vld [vmem:[%s231 + $0x40] sm:$0xff]
        %v527 = vld [vmem:[%s231 + $0x48] sm:$0xff]
        %v528 = vld [vmem:[%s231 + $0x50] sm:$0xff]
        %v529 = vld [vmem:[%s231 + $0x58] sm:$0xff]
        %v530 = vld [vmem:[%s231 + $0x60] sm:$0xff]
        %v531 = vld [vmem:[%s231 + $0x68] sm:$0xff]
        %v532 = vld [vmem:[%s231 + $0x70] sm:$0xff]
        %v533 = vld [vmem:[%s231 + $0x78] sm:$0xff]
        %v534 = vld [vmem:[%s231 + $0x80] sm:$0xff]
        %v535 = vld [vmem:[%s231 + $0x88] sm:$0xff]
        %v536 = vld [vmem:[%s231 + $0x90] sm:$0xff]
        %v537 = vld [vmem:[%s231 + $0x98] sm:$0xff]
        %v538 = vld [vmem:[%s231 + $0xa0] sm:$0xff]
        %v539 = vld [vmem:[%s231 + $0xa8] sm:$0xff]
        %v540 = vld [vmem:[%s231 + $0xb0] sm:$0xff]
        %v541 = vld [vmem:[%s231 + $0xb8] sm:$0xff]
        %v542 = vld [vmem:[%s231 + $0xc0] sm:$0xff]
        %v543 = vld [vmem:[%s231 + $0xc8] sm:$0xff]
        %v544 = vld [vmem:[%s231 + $0xd0] sm:$0xff]
        %v545 = vld [vmem:[%s231 + $0xd8] sm:$0xff]
        %v546 = vld [vmem:[%s231 + $0xe0] sm:$0xff]
        %v547 = vld [vmem:[%s231 + $0xe8] sm:$0xff]
        %v548 = vld [vmem:[%s231 + $0xf0] sm:$0xff]
        %v549 = vld [vmem:[%s231 + $0xf8] sm:$0xff]
        %550 = vmatprep.subr.mxu0 0.0
        %551 = vmatpush1.msra.mxu0 %v518
        %552 = vmatprep.subr.mxu0 0.0
        %553 = vmatpush1.msra.mxu0 %v519
        %554 = vmatprep.subr.mxu0 0.0
        %555 = vmatpush1.msra.mxu0 %v520
        %556 = vmatprep.subr.mxu0 0.0
        %557 = vmatpush1.msra.mxu0 %v521
        %558 = vmatprep.subr.mxu0 0.0
        %559 = vmatpush1.msra.mxu0 %v522
        %560 = vmatprep.subr.mxu0 0.0
        %561 = vmatpush1.msra.mxu0 %v523
        %562 = vmatprep.subr.mxu0 0.0
        %563 = vmatpush1.msra.mxu0 %v524
        %564 = vmatprep.subr.mxu0 0.0
        %565 = vmatpush1.msra.mxu0 %v525
        %566 = vmatprep.subr.mxu0 0.0
        %567 = vmatpush1.msra.mxu0 %v526
        %568 = vmatprep.subr.mxu0 0.0
        %569 = vmatpush1.msra.mxu0 %v527
        %570 = vmatprep.subr.mxu0 0.0
        %571 = vmatpush1.msra.mxu0 %v528
        %572 = vmatprep.subr.mxu0 0.0
        %573 = vmatpush1.msra.mxu0 %v529
        %574 = vmatprep.subr.mxu0 0.0
        %575 = vmatpush1.msra.mxu0 %v530
        %576 = vmatprep.subr.mxu0 0.0
        %577 = vmatpush1.msra.mxu0 %v531
        %578 = vmatprep.subr.mxu0 0.0
        %579 = vmatpush1.msra.mxu0 %v532
        %580 = vmatprep.subr.mxu0 0.0
        %581 = vmatpush1.msra.mxu0 %v533
        %582 = vmatprep.subr.mxu0 0.0
        %583 = vmatpush1.msra.mxu0 %v534
        %584 = vmatprep.subr.mxu0 0.0
        %585 = vmatpush1.msra.mxu0 %v535
        %586 = vmatprep.subr.mxu0 0.0
        %587 = vmatpush1.msra.mxu0 %v536
        %588 = vmatprep.subr.mxu0 0.0
        %589 = vmatpush1.msra.mxu0 %v537
        %590 = vmatprep.subr.mxu0 0.0
        %591 = vmatpush1.msra.mxu0 %v538
        %592 = vmatprep.subr.mxu0 0.0
        %593 = vmatpush1.msra.mxu0 %v539
        %594 = vmatprep.subr.mxu0 0.0
        %595 = vmatpush1.msra.mxu0 %v540
        %596 = vmatprep.subr.mxu0 0.0
        %597 = vmatpush1.msra.mxu0 %v541
        %598 = vmatprep.subr.mxu0 0.0
        %599 = vmatpush1.msra.mxu0 %v542
        %600 = vmatprep.subr.mxu0 0.0
        %601 = vmatpush1.msra.mxu0 %v543
        %602 = vmatprep.subr.mxu0 0.0
        %603 = vmatpush1.msra.mxu0 %v544
        %604 = vmatprep.subr.mxu0 0.0
        %605 = vmatpush1.msra.mxu0 %v545
        %606 = vmatprep.subr.mxu0 0.0
        %607 = vmatpush1.msra.mxu0 %v546
        %608 = vmatprep.subr.mxu0 0.0
        %609 = vmatpush1.msra.mxu0 %v547
        %610 = vmatprep.subr.mxu0 0.0
        %611 = vmatpush1.msra.mxu0 %v548
        %612 = vmatprep.subr.mxu0 0.0
        %613 = vmatpush1.msra.mxu0 %v549
        %614 = vmatprep.mubr.f32.mxu0 %v513
        %615 = vmatmul.mubr.f32.gmra.mrb[0].mxu0 %v512
        %v616 = vpop.f32.mrb[0].mxu0
        %v617 = vadd.f32 0.0, %v616
        %v618 = vpop.f32.mrb[0].mxu0
        %619 = vmatprep.mubr.f32.mxu0 %v515
        %620 = vmatmul.mubr.f32.gmra.mrb[0].mxu0 %v514
        %v621 = vpop.f32.mrb[0].mxu0
        %v622 = vadd.f32 0.0, %v621
        %v623 = vpop.f32.mrb[0].mxu0
        %624 = vdwg.mxu0
        %v625 = vadd.f32 %v516, %v617
        %v626 = vadd.f32 %v517, %v622
        %627 = vst [vmem:[#allocation2] sm:$0xff] %v625
        %628 = vst [vmem:[#allocation2 + $0x8] sm:$0xff] %v626
        %p629 = scmp.eq.s32.totalorder %s24, 1
        // Predicated region
        $region49: #{tpu_custom_call.1} parent=31 // pred_check
          %p630 = pneg %p629
        $region50: #{tpu_custom_call.1} parent=31 // pred_check_branch
          %632 = sbr.rel (%p630) target = $region52
        $region51: #{tpu_custom_call.1} parent=31 // pred_region
          %v633 = vld [vmem:[#allocation2] sm:$0xff]
          %v634 = vld [vmem:[#allocation2 + $0x8] sm:$0xff]
          %635 = vst [vmem:[#allocation9] sm:$0xff] %v633
          %636 = vst [vmem:[#allocation9 + $0x8] sm:$0xff] %v634
        $region52: #{tpu_custom_call.1} parent=31 // pred_fallthru
          _
        // Predicated region
        $region53: #{tpu_custom_call.1} parent=31 // pred_check
          %p637 = pneg %p127
        $region54: #{tpu_custom_call.1} parent=31 // pred_check_branch
          %639 = sbr.rel (%p637) target = $region56
        $region55: #{tpu_custom_call.1} parent=31 // pred_region
          %s640 = smul.u32 2, %s23
          %s642 = ssub.s32 256, 256
          %643 = vsyncadd [#allocation5], %s642
          %s644 = smul.addr %s640, 128
          %s645 = scalar_lea.hbm %s3, %s644
          %s646 = sshll.u32 [#allocation9], 4
          %s647 = int_to_ptr.vmem [resolvable:$true] %s646
          %652 = dma.vmem_to_hbm [thread:$0]  %s647, 256, %s645, [#allocation5], 128, 128, 8
        $region56: #{tpu_custom_call.1} parent=31 // pred_fallthru
          _
        // Predicated region
        $region57: #{tpu_custom_call.1} parent=31 // pred_check
          %p653 = pneg %p127
        $region58: #{tpu_custom_call.1} parent=31 // pred_check_branch
          %655 = sbr.rel (%p653) target = $region60
        $region59: #{tpu_custom_call.1} parent=31 // pred_region
          %656 = dma.done [#allocation5], 256
        $region60: #{tpu_custom_call.1} parent=31 // pred_fallthru
          _
      $region32: #{tpu_custom_call.1} parent=5 // pred_fallthru
        _
      %p657 = scmp.le.s32.totalorder 2, %s14
      // Predicated region
      $region61: #{tpu_custom_call.1} parent=5 // pred_check
        %p658 = pneg %p657
      $region62: #{tpu_custom_call.1} parent=5 // pred_check_branch
        %660 = sbr.rel (%p658) target = $region64
      $region63: #{tpu_custom_call.1} parent=5 // pred_region
        %s661 = ssub.s32 %s14, 2
      $region64: #{tpu_custom_call.1} parent=5 // pred_fallthru
        _
    $region6: #{tpu_custom_call.1} parent=1 // loop_footer
      %s18 = sadd.s32 1, %s14
    $region7: #{tpu_custom_call.1} parent=1 // loop_footer_branch
      %13 = sbr.rel target = $region3
    $region8: #{tpu_custom_call.1} parent=1 // loop_exit
      _
    %662 = vsyncpa [#allocation4], 1
    %s663 = scalar_lea.sflag [#allocation4], 1
    %664 = vsyncpa %s663, 1
    %665 = vsyncpa [#allocation7], 1
    %s666 = scalar_lea.sflag [#allocation7], 1
    %667 = vsyncpa %s666, 1
    %668 = vsyncpa [#allocation5], 1
    %s669 = scalar_lea.sflag [#allocation5], 1
    %670 = vsyncpa %s669, 1

</llo_original>
